<compile_context>
chip_gen: v5e
topology: v5e:2x2
jax: 0.10.0
libtpu: 0.0.40
codegen_flags: <defaults>
</compile_context>

<pallas_src>
import functools

import jax
import jax.numpy as jnp
from jax.experimental import pallas as pl
from jax.experimental.pallas import tpu as pltpu


def _mlp_kernel(x_ref,
                w1_ref, b1_ref,
                w2_ref, b2_ref,
                w3_ref, b3_ref,
                o_ref,
                *, lane_dense_out):
    mx_dtype = w1_ref.dtype          # dtype fed to the MXU (bf16 by default)

    x = x_ref[...]

    # fc1 + bn1 (folded into w1/b1) + relu.  dropout1 is identity at inference.
    h1 = jnp.dot(x, w1_ref[...], preferred_element_type=jnp.float32)
    h1 = jnp.maximum(h1 + b1_ref[...], 0.0)

    # fc2 + bn2 (folded into w2/b2) + relu.  dropout2 is identity at inference.
    h2 = jnp.dot(h1.astype(mx_dtype), w2_ref[...],
                 preferred_element_type=jnp.float32)
    h2 = jnp.maximum(h2 + b2_ref[...], 0.0)

    # fc3
    if lane_dense_out:
        # out_size == 1: contract (1, h2) with (tile_n, h2) on the MXU (NT matmul)
        # so the result lands as a lane-dense (1, tile_n) row -> unmasked full-width
        # stores and a wide write-back DMA, instead of (tile_n, 1) masked vst.msk.
        out = jax.lax.dot_general(
            w3_ref[...], h2.astype(mx_dtype),
            dimension_numbers=(((1,), (1,)), ((), ())),
            preferred_element_type=jnp.float32)            # (1, tile_n)
        out = out + b3_ref[...]                            # b3 is (1, 1)
    else:
        out = jnp.dot(h2.astype(mx_dtype), w3_ref[...],
                      preferred_element_type=jnp.float32)
        out = out + b3_ref[...]

    o_ref[...] = out.astype(o_ref.dtype)


def binary_classifier_forward(x, params, *, tile_n=4096,
                              stream_dtype=jnp.bfloat16):
    """Fused forward pass: batch gridded/pipelined in bf16, weights VMEM-resident."""
    (w1, b1, g1, be1, rm1, rv1,
     w2, b2, g2, be2, rm2, rv2,
     w3, b3) = params
    eps = 1e-5

    # Fold eval-mode BatchNorm into the preceding Linear:
    #   (x@W + b) * s + t  ==  x @ (W*s) + (b*s + t),  s = g/sqrt(rv+eps), t = be - rm*s
    s1 = g1 * jax.lax.rsqrt(rv1 + eps)
    t1 = be1 - rm1 * s1
    s2 = g2 * jax.lax.rsqrt(rv2 + eps)
    t2 = be2 - rm2 * s2

    # MXU feeds stream in bf16 (halves HBM bytes on a mem-bound kernel); biases and
    # all elementwise work stay f32 (v5e has no bf16 VPU), accumulation is f32.
    w1f = (w1 * s1[None, :]).astype(stream_dtype)
    w2f = (w2 * s2[None, :]).astype(stream_dtype)
    b1f = (b1 * s1 + t1)[None, :].astype(jnp.float32)
    b2f = (b2 * s2 + t2)[None, :].astype(jnp.float32)

    N, in_size = x.shape
    hidden = w1.shape[1]
    h2_size = w2.shape[1]
    out_size = w3.shape[1]

    lane_dense_out = (out_size == 1)
    # (1, h2) row for the lane-dense NT matmul; (h2, out) otherwise.
    w3k = (w3.T if lane_dense_out else w3).astype(stream_dtype)
    b3r = b3[None, :].astype(jnp.float32)

    # ---- batch tiling -------------------------------------------------------
    # Tiles are multiples of 128 rows: the (1, tile) output blocks are lane-dense
    # and the bf16 x blocks satisfy sublane/lane tiling without masking.
    max_tile = max(128, (int(tile_n) // 128) * 128)
    tile = min(max_tile, pl.cdiv(N, 128) * 128)
    # v7x megacore: prefer >= 2 batch tiles when there is enough work so
    # dimension_semantics=("parallel",) can shard across its two TensorCores.
    if pl.cdiv(N, tile) < 2 and tile >= 256:
        tile = max(128, ((tile // 2) // 128) * 128)
    n_tiles = pl.cdiv(N, tile)
    n_padded = n_tiles * tile
    n_pad = n_padded - N

    # TODO(synk): supply x in bf16 from upstream (or fuse the convert) so this cast
    # does not cost an extra HBM pass over x.
    x_s = x.astype(stream_dtype)
    x_p = jnp.pad(x_s, ((0, n_pad), (0, 0))) if n_pad else x_s

    grid = (n_tiles,)

    def resident(arr):
        nd = arr.ndim
        # TODO(synk): pipeline_mode=pl.Buffered(1) on these constant-index inputs
        # would avoid double-buffering large weights on v7x's 64 MiB VMEM.
        return pl.BlockSpec(arr.shape, lambda i, _nd=nd: (0,) * _nd)

    in_specs = [
        pl.BlockSpec((tile, in_size), lambda i: (i, 0)),   # streamed activations
        resident(w1f), resident(b1f),
        resident(w2f), resident(b2f),
        resident(w3k), resident(b3r),
    ]

    if lane_dense_out:
        out_shape = jax.ShapeDtypeStruct((1, n_padded), jnp.float32)
        out_specs = pl.BlockSpec((1, tile), lambda i: (0, i))
    else:
        out_shape = jax.ShapeDtypeStruct((n_padded, out_size), jnp.float32)
        out_specs = pl.BlockSpec((tile, out_size), lambda i: (i, 0))

    # Advisory cost so XLA schedules/overlaps the custom call correctly.
    itm = jnp.dtype(stream_dtype).itemsize
    flops = 2 * n_padded * (in_size * hidden + hidden * h2_size + h2_size * out_size)
    bytes_accessed = (itm * (n_padded * in_size + w1f.size + w2f.size + w3k.size)
                      + 4 * (n_padded * out_size + b1f.size + b2f.size + b3r.size))
    cost = pl.CostEstimate(flops=int(flops), transcendentals=0,
                           bytes_accessed=int(bytes_accessed))

    # VMEM budget: double-buffered x/out tiles + intermediates + resident weights,
    # capped against the actual chip's VMEM (64 MiB v7x, 128 MiB v5e/v6e).
    try:
        vmem_cap = int(pltpu.get_tpu_info().vmem_capacity_bytes)
    except Exception:
        vmem_cap = 64 << 20        # conservative fallback (v7x)
    est = (2 * tile * in_size * itm                 # x double buffer
           + 2 * tile * out_size * 4                # out double buffer
           + tile * (hidden + h2_size) * 4          # h1 / h2 intermediates
           + 2 * itm * (w1f.size + w2f.size + w3k.size)
           + 2 * 4 * (b1f.size + b2f.size + b3r.size))
    vmem_limit = int(min(max(2 * est, 16 << 20), int(vmem_cap * 0.85)))

    kernel = functools.partial(_mlp_kernel, lane_dense_out=lane_dense_out)

    out = pl.pallas_call(
        kernel,
        out_shape=out_shape,
        grid=grid,
        in_specs=in_specs,
        out_specs=out_specs,
        compiler_params=pltpu.CompilerParams(
            dimension_semantics=("parallel",),   # batch tiles shard across v7x's 2 TCs
            vmem_limit_bytes=vmem_limit,
        ),
        cost_estimate=cost,
    )(x_p, w1f, b1f, w2f, b2f, w3k, b3r)

    if lane_dense_out:
        # (1, n_padded) -> (N, 1): contiguous reshape + slice, free in the wrapper.
        return out.reshape(n_padded, 1)[:N]
    return out[:N]


def init_params(key, input_size, hidden_size, output_size):
    """Deterministic synthetic parameters matching the PyTorch module shapes."""
    h2 = hidden_size // 2
    ks = jax.random.split(key, 6)

    def linear(kw, kb, fan_in, fan_out):
        bound = 1.0 / jnp.sqrt(fan_in)
        # stored as (in, out) — transposed relative to torch's (out, in)
        w = jax.random.uniform(kw, (fan_in, fan_out), jnp.float32, -bound, bound)
        b = jax.random.uniform(kb, (fan_out,), jnp.float32, -bound, bound)
        return w, b

    w1, b1 = linear(ks[0], ks[1], input_size, hidden_size)
    w2, b2 = linear(ks[2], ks[3], hidden_size, h2)
    w3, b3 = linear(ks[4], ks[5], h2, output_size)

    # BatchNorm1d stats (slightly non-trivial so the fold is actually exercised)
    g1 = jnp.full((hidden_size,), 0.9, jnp.float32)
    be1 = jnp.full((hidden_size,), 0.1, jnp.float32)
    rm1 = jnp.full((hidden_size,), 0.05, jnp.float32)
    rv1 = jnp.full((hidden_size,), 1.1, jnp.float32)

    g2 = jnp.full((h2,), 1.1, jnp.float32)
    be2 = jnp.full((h2,), -0.1, jnp.float32)
    rm2 = jnp.full((h2,), -0.05, jnp.float32)
    rv2 = jnp.full((h2,), 0.9, jnp.float32)

    return (w1, b1, g1, be1, rm1, rv1,
            w2, b2, g2, be2, rm2, rv2,
            w3, b3)


def reference_forward(x, params):
    """Pure-JAX f32 reference (eval-mode BN, dropout=identity)."""
    (w1, b1, g1, be1, rm1, rv1,
     w2, b2, g2, be2, rm2, rv2,
     w3, b3) = params
    eps = 1e-5
    h = x @ w1 + b1
    h = (h - rm1) / jnp.sqrt(rv1 + eps) * g1 + be1
    h = jnp.maximum(h, 0.0)
    h = h @ w2 + b2
    h = (h - rm2) / jnp.sqrt(rv2 + eps) * g2 + be2
    h = jnp.maximum(h, 0.0)
    return h @ w3 + b3


if __name__ == "__main__":
    batch = 8
    input_size = 16
    hidden_size = 32
    output_size = 1

    key = jax.random.PRNGKey(0)
    kx, kp = jax.random.split(key)
    x = jax.random.normal(kx, (batch, input_size), jnp.float32)
    params = init_params(kp, input_size, hidden_size, output_size)

    out = binary_classifier_forward(x, params)
    out = jax.block_until_ready(out)

    ref = reference_forward(x, params)
    assert out.shape == (batch, output_size)
    # bf16-streamed weights/activations with f32 accumulation vs pure-f32 reference.
    assert jnp.allclose(out, ref, atol=5e-2, rtol=5e-2), "mismatch vs reference"

    print("KERNEL_OK")
</pallas_src>

<mosaic_0001>
module attributes {stable_mosaic.version = 11 : i64} {
  func.func @_mlp_kernel(%arg0: i32, %arg1: memref<128x16xbf16, #tpu.memory_space<vmem>>, %arg2: memref<16x32xbf16, #tpu.memory_space<vmem>>, %arg3: memref<1x32xf32, #tpu.memory_space<vmem>>, %arg4: memref<32x16xbf16, #tpu.memory_space<vmem>>, %arg5: memref<1x16xf32, #tpu.memory_space<vmem>>, %arg6: memref<1x16xbf16, #tpu.memory_space<vmem>>, %arg7: memref<1x1xf32, #tpu.memory_space<vmem>>, %arg8: memref<1x128xf32, #tpu.memory_space<vmem>>) attributes {dimension_semantics = [#tpu.dimension_semantics<parallel>], iteration_bounds = array<i64: 1>, scalar_prefetch = 0 : i64, scratch_operands = 0 : i64, tpu.core_type = #tpu.core_type<tc>, window_params = [{transform_indices = @transform_0, window_bounds = array<i64: 128, 16>}, {pipeline_mode = #tpu.pipeline_mode<synchronous>, transform_indices = @transform_1, window_bounds = array<i64: 16, 32>}, {pipeline_mode = #tpu.pipeline_mode<synchronous>, transform_indices = @transform_2, window_bounds = array<i64: 1, 32>}, {pipeline_mode = #tpu.pipeline_mode<synchronous>, transform_indices = @transform_3, window_bounds = array<i64: 32, 16>}, {pipeline_mode = #tpu.pipeline_mode<synchronous>, transform_indices = @transform_4, window_bounds = array<i64: 1, 16>}, {pipeline_mode = #tpu.pipeline_mode<synchronous>, transform_indices = @transform_5, window_bounds = array<i64: 1, 16>}, {pipeline_mode = #tpu.pipeline_mode<synchronous>, transform_indices = @transform_6, window_bounds = array<i64: 1, 1>}, {transform_indices = @transform_7, window_bounds = array<i64: 1, 128>}]} {
    %c0 = arith.constant 0 : index
    %c0_0 = arith.constant 0 : index
    %0 = vector.load %arg1[%c0, %c0_0] : memref<128x16xbf16, #tpu.memory_space<vmem>>, vector<128x16xbf16>
    %c0_1 = arith.constant 0 : index
    %c0_2 = arith.constant 0 : index
    %1 = vector.load %arg2[%c0_1, %c0_2] : memref<16x32xbf16, #tpu.memory_space<vmem>>, vector<16x32xbf16>
    %cst = arith.constant dense<0.000000e+00> : vector<128x32xf32>
    %2 = tpu.matmul %0, %1, %cst {dimension_numbers = #tpu.dot_dimension_numbers<[1], [0], [0], [1], [0, 0, 1, 1], [], []>} : vector<128x16xbf16>, vector<16x32xbf16>, vector<128x32xf32> -> vector<128x32xf32>
    %c0_3 = arith.constant 0 : index
    %c0_4 = arith.constant 0 : index
    %3 = vector.load %arg3[%c0_3, %c0_4] : memref<1x32xf32, #tpu.memory_space<vmem>>, vector<1x32xf32>
    %4 = vector.broadcast %3 : vector<1x32xf32> to vector<128x32xf32>
    %5 = arith.addf %2, %4 : vector<128x32xf32>
    %cst_5 = arith.constant 0.000000e+00 : f32
    %6 = vector.broadcast %cst_5 : f32 to vector<128x32xf32>
    %7 = arith.maximumf %5, %6 : vector<128x32xf32>
    %8 = arith.truncf %7 : vector<128x32xf32> to vector<128x32xbf16>
    %c0_6 = arith.constant 0 : index
    %c0_7 = arith.constant 0 : index
    %9 = vector.load %arg4[%c0_6, %c0_7] : memref<32x16xbf16, #tpu.memory_space<vmem>>, vector<32x16xbf16>
    %cst_8 = arith.constant dense<0.000000e+00> : vector<128x16xf32>
    %10 = tpu.matmul %8, %9, %cst_8 {dimension_numbers = #tpu.dot_dimension_numbers<[1], [0], [0], [1], [0, 0, 1, 1], [], []>} : vector<128x32xbf16>, vector<32x16xbf16>, vector<128x16xf32> -> vector<128x16xf32>
    %c0_9 = arith.constant 0 : index
    %c0_10 = arith.constant 0 : index
    %11 = vector.load %arg5[%c0_9, %c0_10] : memref<1x16xf32, #tpu.memory_space<vmem>>, vector<1x16xf32>
    %12 = vector.broadcast %11 : vector<1x16xf32> to vector<128x16xf32>
    %13 = arith.addf %10, %12 : vector<128x16xf32>
    %cst_11 = arith.constant 0.000000e+00 : f32
    %14 = vector.broadcast %cst_11 : f32 to vector<128x16xf32>
    %15 = arith.maximumf %13, %14 : vector<128x16xf32>
    %c0_12 = arith.constant 0 : index
    %c0_13 = arith.constant 0 : index
    %16 = vector.load %arg6[%c0_12, %c0_13] : memref<1x16xbf16, #tpu.memory_space<vmem>>, vector<1x16xbf16>
    %17 = arith.truncf %15 : vector<128x16xf32> to vector<128x16xbf16>
    %cst_14 = arith.constant dense<0.000000e+00> : vector<1x128xf32>
    %18 = tpu.matmul %16, %17, %cst_14 {dimension_numbers = #tpu.dot_dimension_numbers<[1], [1], [0], [0], [0, 0, 1, 0], [], []>} : vector<1x16xbf16>, vector<128x16xbf16>, vector<1x128xf32> -> vector<1x128xf32>
    %c0_15 = arith.constant 0 : index
    %c0_16 = arith.constant 0 : index
    %19 = vector.load %arg7[%c0_15, %c0_16] : memref<1x1xf32, #tpu.memory_space<vmem>>, vector<1x1xf32>
    %20 = vector.broadcast %19 : vector<1x1xf32> to vector<1x128xf32>
    %21 = arith.addf %18, %20 : vector<1x128xf32>
    %c0_17 = arith.constant 0 : index
    %c0_18 = arith.constant 0 : index
    %22 = vector.load %arg8[%c0_17, %c0_18] : memref<1x128xf32, #tpu.memory_space<vmem>>, vector<1x128xf32>
    tpu.vector_store %arg8[%c0_17, %c0_18], %21 {strides = array<i32>} : memref<1x128xf32, #tpu.memory_space<vmem>>, vector<1x128xf32>,
    return
  }
  func.func @transform_0(%arg0: i32) -> (i32, i32) {
    %c0_i32 = arith.constant 0 : i32
    %c0_i32_0 = arith.constant 0 : i32
    return %arg0, %c0_i32 : i32, i32
  }
  func.func @transform_1(%arg0: i32) -> (i32, i32) {
    %c0_i32 = arith.constant 0 : i32
    %c0_i32_0 = arith.constant 0 : i32
    %c0_i32_1 = arith.constant 0 : i32
    return %c0_i32, %c0_i32_0 : i32, i32
  }
  func.func @transform_2(%arg0: i32) -> (i32, i32) {
    %c0_i32 = arith.constant 0 : i32
    %c0_i32_0 = arith.constant 0 : i32
    %c0_i32_1 = arith.constant 0 : i32
    return %c0_i32, %c0_i32_0 : i32, i32
  }
  func.func @transform_3(%arg0: i32) -> (i32, i32) {
    %c0_i32 = arith.constant 0 : i32
    %c0_i32_0 = arith.constant 0 : i32
    %c0_i32_1 = arith.constant 0 : i32
    return %c0_i32, %c0_i32_0 : i32, i32
  }
  func.func @transform_4(%arg0: i32) -> (i32, i32) {
    %c0_i32 = arith.constant 0 : i32
    %c0_i32_0 = arith.constant 0 : i32
    %c0_i32_1 = arith.constant 0 : i32
    return %c0_i32, %c0_i32_0 : i32, i32
  }
  func.func @transform_5(%arg0: i32) -> (i32, i32) {
    %c0_i32 = arith.constant 0 : i32
    %c0_i32_0 = arith.constant 0 : i32
    %c0_i32_1 = arith.constant 0 : i32
    return %c0_i32, %c0_i32_0 : i32, i32
  }
  func.func @transform_6(%arg0: i32) -> (i32, i32) {
    %c0_i32 = arith.constant 0 : i32
    %c0_i32_0 = arith.constant 0 : i32
    %c0_i32_1 = arith.constant 0 : i32
    return %c0_i32, %c0_i32_0 : i32, i32
  }
  func.func @transform_7(%arg0: i32) -> (i32, i32) {
    %c0_i32 = arith.constant 0 : i32
    %c0_i32_0 = arith.constant 0 : i32
    return %c0_i32, %arg0 : i32, i32
  }
}

</mosaic_0001>

<llo_original>
// kernel: tpu_custom_call.1
$region0: #{tpu_custom_call.1}
  #allocation0 [shape = 'u32[]', space=smem, size = 0x4, offset = 0x4, fixed_abs, tag = 'smem constant byte address 0x4 - core index']
  #allocation1 [shape = 'u32[72,128]{1,0:T(1,128)}', space=vmem, size = 0x9000, scoped, tag = 'internal scratch']
  #allocation2 [shape = 'f32[1,1]{1,0:T(1,128)S(1)}', space=vmem, size = 0x200, scoped, tag = 'scoped memory for tpu_custom_call.1']
  %s0 = inlined_call_operand.vmem [shape: bf16[128,16], index: 0, kind: input, shape index: {}]
  %s1 = inlined_call_operand.vmem [shape: bf16[16,32], index: 1, kind: input, shape index: {}]
  %s2 = inlined_call_operand.vmem [shape: f32[1,32], index: 2, kind: input, shape index: {}]
  %s3 = inlined_call_operand.vmem [shape: bf16[32,16], index: 3, kind: input, shape index: {}]
  %s4 = inlined_call_operand.vmem [shape: f32[1,16], index: 4, kind: input, shape index: {}]
  %s5 = inlined_call_operand.vmem [shape: bf16[1,16], index: 5, kind: input, shape index: {}]
  %s6 = inlined_call_operand.<no memory space> [shape: f32[1,1], index: 6, kind: input, shape index: {}]
  %s7 = inlined_call_operand.hbm [shape: f32[1,128], index: 7, kind: output, shape index: {}]
  %s8 = sld [smem:[#allocation0]]
  $region38: #{tpu_custom_call.1} parent=0
    _
  %s10 = ssub.s32 1, %s8
  %s11 = scalar_select 0, %s10, %s8
  %v12 = vstv %s6
  %13 = vst [vmem:[#allocation2] sm:$0x1] %v12
  $region1: #{tpu_custom_call.1} parent=0
    #allocation3 [shape = 'u8[512]{0}', space=vmem, size = 0x400, scoped, tag = 'output window, operand 0, single buffered']
    #allocation4 [shape = 's32[1]{0}', space=sflag, size = 0x4, scoped, tag = 'scoped memory for tpu_custom_call.1']
    %14 = vsyncpa [#allocation4], 0
    // Predicated region
    $region2: #{tpu_custom_call.1} parent=1 // pred_check
      _
    $region3: #{tpu_custom_call.1} parent=1 // pred_check_branch
      %16 = sbr.rel (0) target = $region5
    $region4: #{tpu_custom_call.1} parent=1 // pred_region
      _
    $region5: #{tpu_custom_call.1} parent=1 // pred_fallthru
      _
    // Predicated region
    $region6: #{tpu_custom_call.1} parent=1 // pred_check
      _
    $region7: #{tpu_custom_call.1} parent=1 // pred_check_branch
      %18 = sbr.rel (0) target = $region9
    $region8: #{tpu_custom_call.1} parent=1 // pred_region
      _
    $region9: #{tpu_custom_call.1} parent=1 // pred_fallthru
      _
    // Predicated region
    $region10: #{tpu_custom_call.1} parent=1 // pred_check
      _
    $region11: #{tpu_custom_call.1} parent=1 // pred_check_branch
      %20 = sbr.rel (0) target = $region13
    $region12: #{tpu_custom_call.1} parent=1 // pred_region
      _
    $region13: #{tpu_custom_call.1} parent=1 // pred_fallthru
      _
    // Predicated region
    $region14: #{tpu_custom_call.1} parent=1 // pred_check
      _
    $region15: #{tpu_custom_call.1} parent=1 // pred_check_branch
      %22 = sbr.rel (0) target = $region17
    $region16: #{tpu_custom_call.1} parent=1 // pred_region
      _
    $region17: #{tpu_custom_call.1} parent=1 // pred_fallthru
      _
    // Predicated region
    $region18: #{tpu_custom_call.1} parent=1 // pred_check
      _
    $region19: #{tpu_custom_call.1} parent=1 // pred_check_branch
      %24 = sbr.rel (0) target = $region21
    $region20: #{tpu_custom_call.1} parent=1 // pred_region
      _
    $region21: #{tpu_custom_call.1} parent=1 // pred_fallthru
      _
    // Predicated region
    $region22: #{tpu_custom_call.1} parent=1 // pred_check
      _
    $region23: #{tpu_custom_call.1} parent=1 // pred_check_branch
      %26 = sbr.rel (0) target = $region25
    $region24: #{tpu_custom_call.1} parent=1 // pred_region
      _
    $region25: #{tpu_custom_call.1} parent=1 // pred_fallthru
      _
    // Predicated region
    $region26: #{tpu_custom_call.1} parent=1 // pred_check
      _
    $region27: #{tpu_custom_call.1} parent=1 // pred_check_branch
      %28 = sbr.rel (0) target = $region29
    $region28: #{tpu_custom_call.1} parent=1 // pred_region
      _
    $region29: #{tpu_custom_call.1} parent=1 // pred_fallthru
      _
    %v30 = vld [vmem:[%s0] sm:$0xf]
    %v31 = vld [vmem:[%s0 + $0x4] sm:$0xf]
    %v32 = vld [vmem:[%s0 + $0x8] sm:$0xf]
    %v33 = vld [vmem:[%s0 + $0xc] sm:$0xf]
    %v34 = vld [vmem:[%s0 + $0x10] sm:$0xf]
    %v35 = vld [vmem:[%s0 + $0x14] sm:$0xf]
    %v36 = vld [vmem:[%s0 + $0x18] sm:$0xf]
    %v37 = vld [vmem:[%s0 + $0x1c] sm:$0xf]
    %v38 = vld [vmem:[%s0 + $0x20] sm:$0xf]
    %v39 = vld [vmem:[%s0 + $0x24] sm:$0xf]
    %v40 = vld [vmem:[%s0 + $0x28] sm:$0xf]
    %v41 = vld [vmem:[%s0 + $0x2c] sm:$0xf]
    %v42 = vld [vmem:[%s0 + $0x30] sm:$0xf]
    %v43 = vld [vmem:[%s0 + $0x34] sm:$0xf]
    %v44 = vld [vmem:[%s0 + $0x38] sm:$0xf]
    %v45 = vld [vmem:[%s0 + $0x3c] sm:$0xf]
    %v46 = vld [vmem:[%s1] sm:$0xf]
    %v47 = vld [vmem:[%s1 + $0x4] sm:$0xf]
    %v48 = vld [vmem:[%s2] sm:$0x1]
    %v50 = vperm.slane %v48, 0
    %v68 = vunpack.c.l.b16 %v30
    %v69 = vunpack.c.l.b16 %v31
    %v70 = vunpack.c.l.b16 %v32
    %v71 = vunpack.c.l.b16 %v33
    %v72 = vunpack.c.l.b16 %v34
    %v73 = vunpack.c.l.b16 %v35
    %v74 = vunpack.c.l.b16 %v36
    %v75 = vunpack.c.l.b16 %v37
    %v76 = vunpack.c.l.b16 %v38
    %v77 = vunpack.c.l.b16 %v39
    %v78 = vunpack.c.l.b16 %v40
    %v79 = vunpack.c.l.b16 %v41
    %v80 = vunpack.c.l.b16 %v42
    %v81 = vunpack.c.l.b16 %v43
    %v82 = vunpack.c.l.b16 %v44
    %v83 = vunpack.c.l.b16 %v45
    %v84 = vpack.c.b16 %v69, %v68
    %v85 = vpack.c.b16 %v71, %v70
    %v86 = vpack.c.b16 %v73, %v72
    %v87 = vpack.c.b16 %v75, %v74
    %v88 = vpack.c.b16 %v77, %v76
    %v89 = vpack.c.b16 %v79, %v78
    %v90 = vpack.c.b16 %v81, %v80
    %v91 = vpack.c.b16 %v83, %v82
    %v94 = vunpack.c.l.b16 %v46
    %v95 = vunpack.c.l.b16 %v47
    %v96 = vpack.c.b16 %v95, %v94
    %vm98 = vcmask 130048
    %v100 = vsel %vm98, %v84, 0
    %v103 = vsel %vm98, %v85, 0
    %v106 = vsel %vm98, %v86, 0
    %v109 = vsel %vm98, %v87, 0
    %v112 = vsel %vm98, %v88, 0
    %v115 = vsel %vm98, %v89, 0
    %v118 = vsel %vm98, %v90, 0
    %v121 = vsel %vm98, %v91, 0
    %123 = vmatpush.bf16.msra.mxu0 0
    %124 = vmatpush.bf16.msra.mxu0 0
    %125 = vmatpush.bf16.msra.mxu0 0
    %126 = vmatpush.bf16.msra.mxu0 0
    %127 = vmatpush.bf16.msra.mxu0 0
    %128 = vmatpush.bf16.msra.mxu0 0
    %129 = vmatpush.bf16.msra.mxu0 0
    %130 = vmatpush.bf16.msra.mxu0 %v96
    %131 = vmatmul.bf16.gmra.mxu0 %v100
    %v132 = vpop.f32.mrf.mxu0
    %v133 = vadd.f32 %v50, %v132
    %v134 = vpop.f32.mrf.mxu0
    %v135 = vadd.f32 %v50, %v134
    %136 = vmatmul.bf16.gmra.mxu0 %v103
    %v137 = vpop.f32.mrf.mxu0
    %v138 = vadd.f32 %v50, %v137
    %v139 = vpop.f32.mrf.mxu0
    %v140 = vadd.f32 %v50, %v139
    %141 = vmatmul.bf16.gmra.mxu0 %v106
    %v142 = vpop.f32.mrf.mxu0
    %v143 = vadd.f32 %v50, %v142
    %v144 = vpop.f32.mrf.mxu0
    %v145 = vadd.f32 %v50, %v144
    %146 = vmatmul.bf16.gmra.mxu0 %v109
    %v147 = vpop.f32.mrf.mxu0
    %v148 = vadd.f32 %v50, %v147
    %v149 = vpop.f32.mrf.mxu0
    %v150 = vadd.f32 %v50, %v149
    %151 = vmatmul.bf16.gmra.mxu0 %v112
    %v152 = vpop.f32.mrf.mxu0
    %v153 = vadd.f32 %v50, %v152
    %v154 = vpop.f32.mrf.mxu0
    %v155 = vadd.f32 %v50, %v154
    %156 = vmatmul.bf16.gmra.mxu0 %v115
    %v157 = vpop.f32.mrf.mxu0
    %v158 = vadd.f32 %v50, %v157
    %v159 = vpop.f32.mrf.mxu0
    %v160 = vadd.f32 %v50, %v159
    %161 = vmatmul.bf16.gmra.mxu0 %v118
    %v162 = vpop.f32.mrf.mxu0
    %v163 = vadd.f32 %v50, %v162
    %v164 = vpop.f32.mrf.mxu0
    %v165 = vadd.f32 %v50, %v164
    %166 = vmatmul.bf16.gmra.mxu0 %v121
    %v167 = vpop.f32.mrf.mxu0
    %v168 = vadd.f32 %v50, %v167
    %v169 = vpop.f32.mrf.mxu0
    %v170 = vadd.f32 %v50, %v169
    %171 = vdwg.mxu0
    %v172 = vmax.f32 %v133, 0.0
    %v173 = vmax.f32 %v135, 0.0
    %v174 = vmax.f32 %v138, 0.0
    %v175 = vmax.f32 %v140, 0.0
    %v176 = vmax.f32 %v143, 0.0
    %v177 = vmax.f32 %v145, 0.0
    %v178 = vmax.f32 %v148, 0.0
    %v179 = vmax.f32 %v150, 0.0
    %v180 = vmax.f32 %v153, 0.0
    %v181 = vmax.f32 %v155, 0.0
    %v182 = vmax.f32 %v158, 0.0
    %v183 = vmax.f32 %v160, 0.0
    %v184 = vmax.f32 %v163, 0.0
    %v185 = vmax.f32 %v165, 0.0
    %v186 = vmax.f32 %v168, 0.0
    %v187 = vmax.f32 %v170, 0.0
    %v188 = vpack.c.bf16 %v173, %v172
    %v189 = vpack.c.bf16 %v175, %v174
    %v190 = vpack.c.bf16 %v177, %v176
    %v191 = vpack.c.bf16 %v179, %v178
    %v192 = vpack.c.bf16 %v181, %v180
    %v193 = vpack.c.bf16 %v183, %v182
    %v194 = vpack.c.bf16 %v185, %v184
    %v195 = vpack.c.bf16 %v187, %v186
    %v196 = vld [vmem:[%s3] sm:$0xf]
    %v197 = vld [vmem:[%s3 + $0x4] sm:$0xf]
    %v198 = vld [vmem:[%s3 + $0x8] sm:$0xf]
    %v199 = vld [vmem:[%s3 + $0xc] sm:$0xf]
    %v200 = vld [vmem:[%s4] sm:$0x1]
    %v202 = vperm.slane %v200, 0
    %v208 = vunpack.c.l.b16 %v196
    %v209 = vunpack.c.l.b16 %v197
    %v210 = vunpack.c.l.b16 %v198
    %v211 = vunpack.c.l.b16 %v199
    %v212 = vpack.c.b16 %v209, %v208
    %v213 = vpack.c.b16 %v211, %v210
    %vm216 = vcmask 261120
    %v218 = vsel %vm216, %v188, 0
    %v221 = vsel %vm216, %v189, 0
    %v224 = vsel %vm216, %v190, 0
    %v227 = vsel %vm216, %v191, 0
    %v230 = vsel %vm216, %v192, 0
    %v233 = vsel %vm216, %v193, 0
    %v236 = vsel %vm216, %v194, 0
    %v239 = vsel %vm216, %v195, 0
    %241 = vmatpush.bf16.msra.mxu0 0
    %242 = vmatpush.bf16.msra.mxu0 0
    %243 = vmatpush.bf16.msra.mxu0 0
    %244 = vmatpush.bf16.msra.mxu0 0
    %245 = vmatpush.bf16.msra.mxu0 0
    %246 = vmatpush.bf16.msra.mxu0 0
    %247 = vmatpush.bf16.msra.mxu0 %v213
    %248 = vmatpush.bf16.msra.mxu0 %v212
    %249 = vmatmul.bf16.gmra.mxu0 %v218
    %v250 = vpop.f32.mrf.mxu0
    %v251 = vadd.f32 %v202, %v250
    %v252 = vpop.f32.mrf.mxu0
    %v253 = vadd.f32 %v202, %v252
    %254 = vmatmul.bf16.gmra.mxu0 %v221
    %v255 = vpop.f32.mrf.mxu0
    %v256 = vadd.f32 %v202, %v255
    %v257 = vpop.f32.mrf.mxu0
    %v258 = vadd.f32 %v202, %v257
    %259 = vmatmul.bf16.gmra.mxu0 %v224
    %v260 = vpop.f32.mrf.mxu0
    %v261 = vadd.f32 %v202, %v260
    %v262 = vpop.f32.mrf.mxu0
    %v263 = vadd.f32 %v202, %v262
    %264 = vmatmul.bf16.gmra.mxu0 %v227
    %v265 = vpop.f32.mrf.mxu0
    %v266 = vadd.f32 %v202, %v265
    %v267 = vpop.f32.mrf.mxu0
    %v268 = vadd.f32 %v202, %v267
    %269 = vmatmul.bf16.gmra.mxu0 %v230
    %v270 = vpop.f32.mrf.mxu0
    %v271 = vadd.f32 %v202, %v270
    %v272 = vpop.f32.mrf.mxu0
    %v273 = vadd.f32 %v202, %v272
    %274 = vmatmul.bf16.gmra.mxu0 %v233
    %v275 = vpop.f32.mrf.mxu0
    %v276 = vadd.f32 %v202, %v275
    %v277 = vpop.f32.mrf.mxu0
    %v278 = vadd.f32 %v202, %v277
    %279 = vmatmul.bf16.gmra.mxu0 %v236
    %v280 = vpop.f32.mrf.mxu0
    %v281 = vadd.f32 %v202, %v280
    %v282 = vpop.f32.mrf.mxu0
    %v283 = vadd.f32 %v202, %v282
    %284 = vmatmul.bf16.gmra.mxu0 %v239
    %v285 = vpop.f32.mrf.mxu0
    %v286 = vadd.f32 %v202, %v285
    %v287 = vpop.f32.mrf.mxu0
    %v288 = vadd.f32 %v202, %v287
    %289 = vdwg.mxu0
    %v290 = vmax.f32 %v251, 0.0
    %v291 = vmax.f32 %v253, 0.0
    %v292 = vmax.f32 %v256, 0.0
    %v293 = vmax.f32 %v258, 0.0
    %v294 = vmax.f32 %v261, 0.0
    %v295 = vmax.f32 %v263, 0.0
    %v296 = vmax.f32 %v266, 0.0
    %v297 = vmax.f32 %v268, 0.0
    %v298 = vmax.f32 %v271, 0.0
    %v299 = vmax.f32 %v273, 0.0
    %v300 = vmax.f32 %v276, 0.0
    %v301 = vmax.f32 %v278, 0.0
    %v302 = vmax.f32 %v281, 0.0
    %v303 = vmax.f32 %v283, 0.0
    %v304 = vmax.f32 %v286, 0.0
    %v305 = vmax.f32 %v288, 0.0
    %v306 = vld [vmem:[%s5] sm:$0x1]
    %v307 = vpack.c.bf16 %v291, %v290
    %v308 = vpack.c.bf16 %v293, %v292
    %v309 = vpack.c.bf16 %v295, %v294
    %v310 = vpack.c.bf16 %v297, %v296
    %v311 = vpack.c.bf16 %v299, %v298
    %v312 = vpack.c.bf16 %v301, %v300
    %v313 = vpack.c.bf16 %v303, %v302
    %v314 = vpack.c.bf16 %v305, %v304
    %v315 = vld [vmem:[#allocation2] sm:$0x1]
    %317 = vset.pattern.permute.xlu0 0
    %318 = vperm.xlu0 %317, %v315
    %v319 = vpop.permute.xlu0 %318
    %v321 = vperm.slane %v319, 0
    %v323 = vsel %vm98, %v306, 0
    %v326 = vsel %vm98, %v307, 0
    %v329 = vsel %vm98, %v308, 0
    %v332 = vsel %vm98, %v309, 0
    %v335 = vsel %vm98, %v310, 0
    %v338 = vsel %vm98, %v311, 0
    %v341 = vsel %vm98, %v312, 0
    %v344 = vsel %vm98, %v313, 0
    %v347 = vsel %vm98, %v314, 0
    %349 = vmatpush.bf16.xpose.msra.mxu0 %v347
    %350 = vmatpush.bf16.xpose.msra.mxu0 %v344
    %351 = vmatpush.bf16.xpose.msra.mxu0 %v341
    %352 = vmatpush.bf16.xpose.msra.mxu0 %v338
    %353 = vmatpush.bf16.xpose.msra.mxu0 %v335
    %354 = vmatpush.bf16.xpose.msra.mxu0 %v332
    %355 = vmatpush.bf16.xpose.msra.mxu0 %v329
    %356 = vmatpush.bf16.xpose.msra.mxu0 %v326
    %357 = vmatmul.bf16.gmra.mxu0 %v323
    %v358 = vpop.f32.mrf.mxu0
    %v359 = vadd.f32 %v321, %v358
    %v360 = vpop.f32.mrf.mxu0
    %361 = vdwg.mxu0
    %362 = vst [vmem:[#allocation3] sm:$0x1] %v359
    // Predicated region
    $region30: #{tpu_custom_call.1} parent=1 // pred_check
      _
    $region31: #{tpu_custom_call.1} parent=1 // pred_check_branch
      %364 = sbr.rel (0) target = $region33
    $region32: #{tpu_custom_call.1} parent=1 // pred_region
      %366 = vsyncadd [#allocation4], 0
      %s368 = sshll.u32 [#allocation3], 4
      %s369 = int_to_ptr.vmem [resolvable:$true] %s368
      %s370 = sshll.u32 %s7, 4
      %s371 = int_to_ptr.hbm [resolvable:$true] %s370
      %373 = dma.vmem_to_hbm [thread:$0]  %s369, 16, %s371, [#allocation4]
    $region33: #{tpu_custom_call.1} parent=1 // pred_fallthru
      _
    // Predicated region
    $region34: #{tpu_custom_call.1} parent=1 // pred_check
      _
    $region35: #{tpu_custom_call.1} parent=1 // pred_check_branch
      %375 = sbr.rel (0) target = $region37
    $region36: #{tpu_custom_call.1} parent=1 // pred_region
      %377 = dma.done [#allocation4], 16
    $region37: #{tpu_custom_call.1} parent=1 // pred_fallthru
      _
    %378 = vsyncpa [#allocation4], 1

</llo_original>
